<compile_context>
chip_gen: v7x
topology: tpu7x:2x2x1
jax: 0.10.0
libtpu: 0.0.40
codegen_flags: <defaults>
</compile_context>

<pallas_src>
import functools

import jax
import jax.numpy as jnp
from jax.experimental import pallas as pl
from jax.experimental.pallas import tpu as pltpu


def _residual_layer_kernel(xt_ref, wc_ref, bc_ref, wrs_ref, brs_ref, out_ref,
                           *, C, gate_dtype):
    # ---- dilated conv over all K taps as a single MXU matmul on the im2col slab:
    #      acc[r, o] = sum_{k,c} xt[r, k*C + c] * Wc[k*C + c, o]
    acc = jnp.dot(xt_ref[...], wc_ref[...],
                  preferred_element_type=jnp.float32) + bc_ref[...]    # (rows, 2C) f32

    # ---- gated activation; bf16 on v6e/v7x (EUP bf16), f32 on v5e via gate_dtype.
    g = acc.astype(gate_dtype)
    gate = jnp.tanh(g[:, :C]) * jax.nn.sigmoid(g[:, C:])               # (rows, C)

    # ---- fused res/skip 1x1 convs: one matmul against [Wr | Ws].
    wrs = wrs_ref[...]
    o = jnp.dot(gate.astype(wrs.dtype), wrs,
                preferred_element_type=jnp.float32) + brs_ref[...]     # (rows, 2C)
    out_ref[...] = o.astype(out_ref.dtype)


def residual_layer_forward(x, lambd, params, *, K, dilation,
                           matmul_dtype=jnp.bfloat16, gate_dtype=None,
                           tile_rows=None):
    """x: (B, C, 1, L) NCHW, lambd: (B, 512). Returns (res, skip), each (B, C, 1, L)."""
    B, C, _, L = x.shape
    C2 = 2 * C
    rows = B * L
    if gate_dtype is None:
        gate_dtype = matmul_dtype   # bf16 gate on the MXU path; pass jnp.float32 on v5e

    # ---- hoisted into one XLA fusion: lambda Linear + broadcast add + 'same' pad + im2col.
    lam = lambd.astype(jnp.float32) @ params["Wl"] + params["bl"]             # (B, C)
    x_blc = jnp.transpose(x[:, :, 0, :], (0, 2, 1)).astype(jnp.float32)       # (B, L, C)
    xt = x_blc + lam[:, None, :]
    total_pad = dilation * (K - 1)
    left = total_pad // 2                       # matches PyTorch padding='same' split
    xp = jnp.pad(xt, ((0, 0), (left, total_pad - left), (0, 0)))              # (B, L+pad, C)
    cols = jnp.concatenate(
        [xp[:, k * dilation:k * dilation + L, :] for k in range(K)], axis=-1)  # (B, L, K*C)
    xt2 = cols.reshape(rows, K * C).astype(matmul_dtype)

    # ---- fused weights (layout plumbing, done once in the wrapper).
    wc = params["Wc"].reshape(K * C, C2).astype(matmul_dtype)    # tap-major rows, matches slab
    wrs = jnp.concatenate([params["Wr"], params["Ws"]], axis=1).astype(matmul_dtype)  # (C, 2C)
    bc = params["bc"].astype(jnp.float32)                                             # (1, 2C)
    brs = jnp.concatenate([params["br"], params["bs"]], axis=1).astype(jnp.float32)   # (1, 2C)

    # ---- row-tiled grid: one block at small sizes, 512/1024-row tiles at large B*L so
    #      BlockSpec double-buffering hides HBM traffic.  Every row is independent after
    #      im2col, so tiles may span batch boundaries freely.
    if tile_rows is None:
        tile_rows = rows
        for cand in (1024, 512):
            if rows > 2 * cand and rows % cand == 0:
                tile_rows = cand
                break
    assert rows % tile_rows == 0
    n_tiles = rows // tile_rows

    out_dtype = jnp.bfloat16 if matmul_dtype == jnp.bfloat16 else jnp.float32

    kernel = functools.partial(_residual_layer_kernel, C=C, gate_dtype=gate_dtype)

    # NOTE: per-block VMEM (double-buffered input tile + output tile + weights) is tiny
    # here and well under the default scoped limit on v5e/v6e/v7x; raise vmem_limit_bytes
    # only if tile_rows is pushed past a few thousand rows.
    # TODO(synk): for production L >= 128, a time-on-lanes layout ((B*2C, L) slabs with
    # taps via pltpu.roll) would make the elementwise/store traffic fully lane-dense.
    out2 = pl.pallas_call(
        kernel,
        out_shape=jax.ShapeDtypeStruct((rows, C2), out_dtype),
        grid_spec=pltpu.PrefetchScalarGridSpec(
            num_scalar_prefetch=0,
            grid=(n_tiles,),
            in_specs=[
                pl.BlockSpec((tile_rows, K * C), lambda g: (g, 0)),   # im2col activations
                pl.BlockSpec((K * C, C2), lambda g: (0, 0)),          # fused conv weight
                pl.BlockSpec((1, C2), lambda g: (0, 0)),              # conv bias
                pl.BlockSpec((C, C2), lambda g: (0, 0)),              # [Wr | Ws]
                pl.BlockSpec((1, C2), lambda g: (0, 0)),              # [br | bs]
            ],
            out_specs=pl.BlockSpec((tile_rows, C2), lambda g: (g, 0)),
        ),
        compiler_params=pltpu.CompilerParams(dimension_semantics=("parallel",)),
    )(xt2, wc, bc, wrs, brs)

    out = out2.astype(jnp.float32).reshape(B, L, C2)
    to_nchw = lambda y: jnp.transpose(y, (0, 2, 1))[:, :, None, :]
    return to_nchw(out[..., :C]), to_nchw(out[..., C:])


def ref_forward(x, lambd, p, *, K, dilation):
    """Pure-JAX f32 reference with identical semantics (for validation)."""
    B, C, _, L = x.shape
    lam = lambd @ p["Wl"] + p["bl"]                            # (B, C)
    x_blc = jnp.transpose(x[:, :, 0, :], (0, 2, 1))
    xt = x_blc + lam[:, None, :]
    total = dilation * (K - 1)
    left = total // 2
    xp = jnp.pad(xt, ((0, 0), (left, total - left), (0, 0)))
    acc = jnp.zeros((B, L, 2 * C), jnp.float32) + p["bc"]
    for k in range(K):
        acc = acc + xp[:, k * dilation:k * dilation + L, :] @ p["Wc"][k]
    gate = jnp.tanh(acc[..., :C]) * jax.nn.sigmoid(acc[..., C:])
    res = gate @ p["Wr"] + p["br"]
    skip = gate @ p["Ws"] + p["bs"]
    to_nchw = lambda y: jnp.transpose(y, (0, 2, 1))[:, :, None, :]
    return to_nchw(res), to_nchw(skip)


if __name__ == "__main__":
    # Module hyperparameters: C residual channels, layer index i, n layers/block, filter K
    C, i_layer, n_layers, K = 16, 1, 3, 3
    dilation = 2 ** i_layer % n_layers      # == 2 (matches PyTorch `2 ** i % n`)
    B, L = 4, 64

    key = jax.random.PRNGKey(0)
    ks = jax.random.split(key, 10)
    params = {
        # Linear(512, C): stored pre-transposed as (512, C); bias (1, C)
        "Wl": jax.random.normal(ks[0], (512, C), jnp.float32) * 0.05,
        "bl": jax.random.normal(ks[1], (1, C), jnp.float32) * 0.05,
        # Conv2d(C, 2C, (1,K)): per-tap matrices (K, C, 2C)  (tap k == W[:, :, 0, k].T)
        "Wc": jax.random.normal(ks[2], (K, C, 2 * C), jnp.float32) * 0.1,
        "bc": jax.random.normal(ks[3], (1, 2 * C), jnp.float32) * 0.05,
        # Conv2d(C, C, 1) res / skip: (C, C) matrices
        "Wr": jax.random.normal(ks[4], (C, C), jnp.float32) * 0.1,
        "br": jax.random.normal(ks[5], (1, C), jnp.float32) * 0.05,
        "Ws": jax.random.normal(ks[6], (C, C), jnp.float32) * 0.1,
        "bs": jax.random.normal(ks[7], (1, C), jnp.float32) * 0.05,
    }

    x = jax.random.normal(ks[8], (B, C, 1, L), jnp.float32)
    lambd = jax.random.normal(ks[9], (B, 512), jnp.float32)

    res_ref, skip_ref = ref_forward(x, lambd, params, K=K, dilation=dilation)

    # f32-operand path: semantic check against the f32 reference.
    # (tolerance covers TPU matmul precision-regime differences between XLA and Mosaic)
    res32, skip32 = residual_layer_forward(x, lambd, params, K=K, dilation=dilation,
                                           matmul_dtype=jnp.float32)
    res32, skip32 = jax.block_until_ready((res32, skip32))
    assert res32.shape == (B, C, 1, L) and skip32.shape == (B, C, 1, L)
    assert jnp.allclose(res32, res_ref, atol=5e-3, rtol=5e-3)
    assert jnp.allclose(skip32, skip_ref, atol=5e-3, rtol=5e-3)

    # default bf16-MXU / bf16-gate / bf16-output path: looser tolerance vs f32 reference.
    res16, skip16 = residual_layer_forward(x, lambd, params, K=K, dilation=dilation)
    res16, skip16 = jax.block_until_ready((res16, skip16))
    assert res16.shape == (B, C, 1, L) and skip16.shape == (B, C, 1, L)
    assert jnp.allclose(res16, res_ref, atol=5e-2, rtol=5e-2)
    assert jnp.allclose(skip16, skip_ref, atol=5e-2, rtol=5e-2)

    print("KERNEL_OK")
</pallas_src>

<mosaic_0001>
module attributes {stable_mosaic.version = 11 : i64} {
  func.func @_residual_layer_kernel(%arg0: i32, %arg1: memref<256x48xf32, #tpu.memory_space<vmem>>, %arg2: memref<48x32xf32, #tpu.memory_space<vmem>>, %arg3: memref<1x32xf32, #tpu.memory_space<vmem>>, %arg4: memref<16x32xf32, #tpu.memory_space<vmem>>, %arg5: memref<1x32xf32, #tpu.memory_space<vmem>>, %arg6: memref<256x32xf32, #tpu.memory_space<vmem>>) attributes {dimension_semantics = [#tpu.dimension_semantics<parallel>], iteration_bounds = array<i64: 1>, scalar_prefetch = 0 : i64, scratch_operands = 0 : i64, tpu.core_type = #tpu.core_type<tc>, window_params = [{transform_indices = @transform_0, window_bounds = array<i64: 256, 48>}, {pipeline_mode = #tpu.pipeline_mode<synchronous>, transform_indices = @transform_1, window_bounds = array<i64: 48, 32>}, {pipeline_mode = #tpu.pipeline_mode<synchronous>, transform_indices = @transform_2, window_bounds = array<i64: 1, 32>}, {pipeline_mode = #tpu.pipeline_mode<synchronous>, transform_indices = @transform_3, window_bounds = array<i64: 16, 32>}, {pipeline_mode = #tpu.pipeline_mode<synchronous>, transform_indices = @transform_4, window_bounds = array<i64: 1, 32>}, {transform_indices = @transform_5, window_bounds = array<i64: 256, 32>}]} {
    %c0 = arith.constant 0 : index
    %c0_0 = arith.constant 0 : index
    %0 = vector.load %arg1[%c0, %c0_0] : memref<256x48xf32, #tpu.memory_space<vmem>>, vector<256x48xf32>
    %c0_1 = arith.constant 0 : index
    %c0_2 = arith.constant 0 : index
    %1 = vector.load %arg2[%c0_1, %c0_2] : memref<48x32xf32, #tpu.memory_space<vmem>>, vector<48x32xf32>
    %cst = arith.constant dense<0.000000e+00> : vector<256x32xf32>
    %2 = tpu.matmul %0, %1, %cst {dimension_numbers = #tpu.dot_dimension_numbers<[1], [0], [0], [1], [0, 0, 1, 1], [], []>} : vector<256x48xf32>, vector<48x32xf32>, vector<256x32xf32> -> vector<256x32xf32>
    %c0_3 = arith.constant 0 : index
    %c0_4 = arith.constant 0 : index
    %3 = vector.load %arg3[%c0_3, %c0_4] : memref<1x32xf32, #tpu.memory_space<vmem>>, vector<1x32xf32>
    %4 = vector.broadcast %3 : vector<1x32xf32> to vector<256x32xf32>
    %5 = arith.addf %2, %4 : vector<256x32xf32>
    %6 = vector.extract_strided_slice %5 {offsets = [0, 0], sizes = [256, 16], strides = [1, 1]} : vector<256x32xf32> to vector<256x16xf32>
    %7 = math.tanh %6 : vector<256x16xf32>
    %8 = vector.extract_strided_slice %5 {offsets = [0, 16], sizes = [256, 16], strides = [1, 1]} : vector<256x32xf32> to vector<256x16xf32>
    %9 = arith.negf %8 : vector<256x16xf32>
    %10 = math.exp %9 : vector<256x16xf32>
    %cst_5 = arith.constant 1.000000e+00 : f32
    %11 = vector.broadcast %cst_5 : f32 to vector<256x16xf32>
    %12 = arith.addf %11, %10 : vector<256x16xf32>
    %13 = arith.divf %11, %12 : vector<256x16xf32>
    %14 = arith.mulf %7, %13 : vector<256x16xf32>
    %c0_6 = arith.constant 0 : index
    %c0_7 = arith.constant 0 : index
    %15 = vector.load %arg4[%c0_6, %c0_7] : memref<16x32xf32, #tpu.memory_space<vmem>>, vector<16x32xf32>
    %cst_8 = arith.constant dense<0.000000e+00> : vector<256x32xf32>
    %16 = tpu.matmul %14, %15, %cst_8 {dimension_numbers = #tpu.dot_dimension_numbers<[1], [0], [0], [1], [0, 0, 1, 1], [], []>} : vector<256x16xf32>, vector<16x32xf32>, vector<256x32xf32> -> vector<256x32xf32>
    %c0_9 = arith.constant 0 : index
    %c0_10 = arith.constant 0 : index
    %17 = vector.load %arg5[%c0_9, %c0_10] : memref<1x32xf32, #tpu.memory_space<vmem>>, vector<1x32xf32>
    %18 = vector.broadcast %17 : vector<1x32xf32> to vector<256x32xf32>
    %19 = arith.addf %16, %18 : vector<256x32xf32>
    %c0_11 = arith.constant 0 : index
    %c0_12 = arith.constant 0 : index
    %20 = vector.load %arg6[%c0_11, %c0_12] : memref<256x32xf32, #tpu.memory_space<vmem>>, vector<256x32xf32>
    tpu.vector_store %arg6[%c0_11, %c0_12], %19 {strides = array<i32>} : memref<256x32xf32, #tpu.memory_space<vmem>>, vector<256x32xf32>,
    return
  }
  func.func @transform_0(%arg0: i32) -> (i32, i32) {
    %c0_i32 = arith.constant 0 : i32
    %c0_i32_0 = arith.constant 0 : i32
    return %arg0, %c0_i32 : i32, i32
  }
  func.func @transform_1(%arg0: i32) -> (i32, i32) {
    %c0_i32 = arith.constant 0 : i32
    %c0_i32_0 = arith.constant 0 : i32
    %c0_i32_1 = arith.constant 0 : i32
    return %c0_i32, %c0_i32_0 : i32, i32
  }
  func.func @transform_2(%arg0: i32) -> (i32, i32) {
    %c0_i32 = arith.constant 0 : i32
    %c0_i32_0 = arith.constant 0 : i32
    %c0_i32_1 = arith.constant 0 : i32
    return %c0_i32, %c0_i32_0 : i32, i32
  }
  func.func @transform_3(%arg0: i32) -> (i32, i32) {
    %c0_i32 = arith.constant 0 : i32
    %c0_i32_0 = arith.constant 0 : i32
    %c0_i32_1 = arith.constant 0 : i32
    return %c0_i32, %c0_i32_0 : i32, i32
  }
  func.func @transform_4(%arg0: i32) -> (i32, i32) {
    %c0_i32 = arith.constant 0 : i32
    %c0_i32_0 = arith.constant 0 : i32
    %c0_i32_1 = arith.constant 0 : i32
    return %c0_i32, %c0_i32_0 : i32, i32
  }
  func.func @transform_5(%arg0: i32) -> (i32, i32) {
    %c0_i32 = arith.constant 0 : i32
    %c0_i32_0 = arith.constant 0 : i32
    return %arg0, %c0_i32 : i32, i32
  }
}

</mosaic_0001>

<llo_original>
// kernel: tpu_custom_call.1
$region0: #{tpu_custom_call.1}
  #allocation0 [shape = 'u32[]', space=smem, size = 0x4, offset = 0x4, fixed_abs, tag = 'smem constant byte address 0x4 - core index']
  #allocation1 [shape = 'u32[144,128]{1,0:T(1,128)}', space=vmem, size = 0x12000, scoped, tag = 'internal scratch']
  %s0 = inlined_call_operand.vmem [shape: f32[256,48], index: 0, kind: input, shape index: {}]
  %s1 = inlined_call_operand.vmem [shape: f32[48,32], index: 1, kind: input, shape index: {}]
  %s2 = inlined_call_operand.vmem [shape: f32[1,32], index: 2, kind: input, shape index: {}]
  %s3 = inlined_call_operand.vmem [shape: f32[16,32], index: 3, kind: input, shape index: {}]
  %s4 = inlined_call_operand.vmem [shape: f32[1,32], index: 4, kind: input, shape index: {}]
  %s5 = inlined_call_operand.vmem [shape: f32[256,32], index: 5, kind: output, shape index: {}]
  %s6 = sld [smem:[#allocation0]]
  $region30: #{tpu_custom_call.1} parent=0
    _
  %s8 = ssub.s32 1, %s6
  %s9 = scalar_select 0, %s8, %s6
  // Predicated region
  $region2: #{tpu_custom_call.1} parent=0 // pred_check
    _
  $region3: #{tpu_custom_call.1} parent=0 // pred_check_branch
    %11 = sbr.rel (0) target = $region5
  $region4: #{tpu_custom_call.1} parent=0 // pred_region
    _
  $region5: #{tpu_custom_call.1} parent=0 // pred_fallthru
    _
  // Predicated region
  $region6: #{tpu_custom_call.1} parent=0 // pred_check
    _
  $region7: #{tpu_custom_call.1} parent=0 // pred_check_branch
    %13 = sbr.rel (0) target = $region9
  $region8: #{tpu_custom_call.1} parent=0 // pred_region
    _
  $region9: #{tpu_custom_call.1} parent=0 // pred_fallthru
    _
  // Predicated region
  $region10: #{tpu_custom_call.1} parent=0 // pred_check
    _
  $region11: #{tpu_custom_call.1} parent=0 // pred_check_branch
    %15 = sbr.rel (0) target = $region13
  $region12: #{tpu_custom_call.1} parent=0 // pred_region
    _
  $region13: #{tpu_custom_call.1} parent=0 // pred_fallthru
    _
  // Predicated region
  $region14: #{tpu_custom_call.1} parent=0 // pred_check
    _
  $region15: #{tpu_custom_call.1} parent=0 // pred_check_branch
    %17 = sbr.rel (0) target = $region17
  $region16: #{tpu_custom_call.1} parent=0 // pred_region
    _
  $region17: #{tpu_custom_call.1} parent=0 // pred_fallthru
    _
  // Predicated region
  $region18: #{tpu_custom_call.1} parent=0 // pred_check
    _
  $region19: #{tpu_custom_call.1} parent=0 // pred_check_branch
    %19 = sbr.rel (0) target = $region21
  $region20: #{tpu_custom_call.1} parent=0 // pred_region
    _
  $region21: #{tpu_custom_call.1} parent=0 // pred_fallthru
    _
  %v20 = vld [vmem:[%s0] sm:$0xff]
  %v21 = vld [vmem:[%s0 + $0x8] sm:$0xff]
  %v22 = vld [vmem:[%s0 + $0x10] sm:$0xff]
  %v23 = vld [vmem:[%s0 + $0x18] sm:$0xff]
  %v24 = vld [vmem:[%s0 + $0x20] sm:$0xff]
  %v25 = vld [vmem:[%s0 + $0x28] sm:$0xff]
  %v26 = vld [vmem:[%s0 + $0x30] sm:$0xff]
  %v27 = vld [vmem:[%s0 + $0x38] sm:$0xff]
  %v28 = vld [vmem:[%s0 + $0x40] sm:$0xff]
  %v29 = vld [vmem:[%s0 + $0x48] sm:$0xff]
  %v30 = vld [vmem:[%s0 + $0x50] sm:$0xff]
  %v31 = vld [vmem:[%s0 + $0x58] sm:$0xff]
  %v32 = vld [vmem:[%s0 + $0x60] sm:$0xff]
  %v33 = vld [vmem:[%s0 + $0x68] sm:$0xff]
  %v34 = vld [vmem:[%s0 + $0x70] sm:$0xff]
  %v35 = vld [vmem:[%s0 + $0x78] sm:$0xff]
  %v36 = vld [vmem:[%s0 + $0x80] sm:$0xff]
  %v37 = vld [vmem:[%s0 + $0x88] sm:$0xff]
  %v38 = vld [vmem:[%s0 + $0x90] sm:$0xff]
  %v39 = vld [vmem:[%s0 + $0x98] sm:$0xff]
  %v40 = vld [vmem:[%s0 + $0xa0] sm:$0xff]
  %v41 = vld [vmem:[%s0 + $0xa8] sm:$0xff]
  %v42 = vld [vmem:[%s0 + $0xb0] sm:$0xff]
  %v43 = vld [vmem:[%s0 + $0xb8] sm:$0xff]
  %v44 = vld [vmem:[%s0 + $0xc0] sm:$0xff]
  %v45 = vld [vmem:[%s0 + $0xc8] sm:$0xff]
  %v46 = vld [vmem:[%s0 + $0xd0] sm:$0xff]
  %v47 = vld [vmem:[%s0 + $0xd8] sm:$0xff]
  %v48 = vld [vmem:[%s0 + $0xe0] sm:$0xff]
  %v49 = vld [vmem:[%s0 + $0xe8] sm:$0xff]
  %v50 = vld [vmem:[%s0 + $0xf0] sm:$0xff]
  %v51 = vld [vmem:[%s0 + $0xf8] sm:$0xff]
  %v52 = vld [vmem:[%s1] sm:$0xff]
  %v53 = vld [vmem:[%s1 + $0x8] sm:$0xff]
  %v54 = vld [vmem:[%s1 + $0x10] sm:$0xff]
  %v55 = vld [vmem:[%s1 + $0x18] sm:$0xff]
  %v56 = vld [vmem:[%s1 + $0x20] sm:$0xff]
  %v57 = vld [vmem:[%s1 + $0x28] sm:$0xff]
  %v58 = vld [vmem:[%s2] sm:$0x1]
  %v60 = vlaneseq
  %v61 = vshrl.u32 %v60, 7
  %v62 = vsub.s32 0, %v61
  %v63 = vrot.slane %v58, %v62
  %vm65 = vcmask 392192
  %v67 = vsel %vm65, %v20, 0
  %v70 = vsel %vm65, %v21, 0
  %v73 = vsel %vm65, %v22, 0
  %v76 = vsel %vm65, %v23, 0
  %v79 = vsel %vm65, %v24, 0
  %v82 = vsel %vm65, %v25, 0
  %v85 = vsel %vm65, %v26, 0
  %v88 = vsel %vm65, %v27, 0
  %v91 = vsel %vm65, %v28, 0
  %v94 = vsel %vm65, %v29, 0
  %v97 = vsel %vm65, %v30, 0
  %v100 = vsel %vm65, %v31, 0
  %v103 = vsel %vm65, %v32, 0
  %v106 = vsel %vm65, %v33, 0
  %v109 = vsel %vm65, %v34, 0
  %v112 = vsel %vm65, %v35, 0
  %v115 = vsel %vm65, %v36, 0
  %v118 = vsel %vm65, %v37, 0
  %v121 = vsel %vm65, %v38, 0
  %v124 = vsel %vm65, %v39, 0
  %v127 = vsel %vm65, %v40, 0
  %v130 = vsel %vm65, %v41, 0
  %v133 = vsel %vm65, %v42, 0
  %v136 = vsel %vm65, %v43, 0
  %v139 = vsel %vm65, %v44, 0
  %v142 = vsel %vm65, %v45, 0
  %v145 = vsel %vm65, %v46, 0
  %v148 = vsel %vm65, %v47, 0
  %v151 = vsel %vm65, %v48, 0
  %v154 = vsel %vm65, %v49, 0
  %v157 = vsel %vm65, %v50, 0
  %v160 = vsel %vm65, %v51, 0
  %162 = vmatprep.subr.mxu0 0.0
  %163 = vmatpush1.msra.mxu0 %v52
  %164 = vmatprep.subr.mxu0 0.0
  %165 = vmatpush1.msra.mxu0 %v53
  %166 = vmatprep.subr.mxu0 0.0
  %167 = vmatpush1.msra.mxu0 %v54
  %168 = vmatprep.subr.mxu0 0.0
  %169 = vmatpush1.msra.mxu0 %v55
  %170 = vmatprep.subr.mxu0 0.0
  %171 = vmatpush1.msra.mxu0 %v56
  %172 = vmatprep.subr.mxu0 0.0
  %173 = vmatpush1.msra.mxu0 %v57
  %174 = vmatprep.subr.mxu0 0.0
  %175 = vmatpush1.msra.mxu0 0.0
  %176 = vmatprep.subr.mxu0 0.0
  %177 = vmatpush1.msra.mxu0 0.0
  %178 = vmatprep.subr.mxu0 0.0
  %179 = vmatpush1.msra.mxu0 0.0
  %180 = vmatprep.subr.mxu0 0.0
  %181 = vmatpush1.msra.mxu0 0.0
  %182 = vmatprep.subr.mxu0 0.0
  %183 = vmatpush1.msra.mxu0 0.0
  %184 = vmatprep.subr.mxu0 0.0
  %185 = vmatpush1.msra.mxu0 0.0
  %186 = vmatprep.subr.mxu0 0.0
  %187 = vmatpush1.msra.mxu0 0.0
  %188 = vmatprep.subr.mxu0 0.0
  %189 = vmatpush1.msra.mxu0 0.0
  %190 = vmatprep.subr.mxu0 0.0
  %191 = vmatpush1.msra.mxu0 0.0
  %192 = vmatprep.subr.mxu0 0.0
  %193 = vmatpush1.msra.mxu0 0.0
  %194 = vmatprep.subr.mxu0 0.0
  %195 = vmatpush1.msra.mxu0 0.0
  %196 = vmatprep.subr.mxu0 0.0
  %197 = vmatpush1.msra.mxu0 0.0
  %198 = vmatprep.subr.mxu0 0.0
  %199 = vmatpush1.msra.mxu0 0.0
  %200 = vmatprep.subr.mxu0 0.0
  %201 = vmatpush1.msra.mxu0 0.0
  %202 = vmatprep.subr.mxu0 0.0
  %203 = vmatpush1.msra.mxu0 0.0
  %204 = vmatprep.subr.mxu0 0.0
  %205 = vmatpush1.msra.mxu0 0.0
  %206 = vmatprep.subr.mxu0 0.0
  %207 = vmatpush1.msra.mxu0 0.0
  %208 = vmatprep.subr.mxu0 0.0
  %209 = vmatpush1.msra.mxu0 0.0
  %210 = vmatprep.subr.mxu0 0.0
  %211 = vmatpush1.msra.mxu0 0.0
  %212 = vmatprep.subr.mxu0 0.0
  %213 = vmatpush1.msra.mxu0 0.0
  %214 = vmatprep.subr.mxu0 0.0
  %215 = vmatpush1.msra.mxu0 0.0
  %216 = vmatprep.subr.mxu0 0.0
  %217 = vmatpush1.msra.mxu0 0.0
  %218 = vmatprep.subr.mxu0 0.0
  %219 = vmatpush1.msra.mxu0 0.0
  %220 = vmatprep.subr.mxu0 0.0
  %221 = vmatpush1.msra.mxu0 0.0
  %222 = vmatprep.subr.mxu0 0.0
  %223 = vmatpush1.msra.mxu0 0.0
  %224 = vmatprep.subr.mxu0 0.0
  %225 = vmatpush1.msra.mxu0 0.0
  %226 = vmatprep.mubr.f32.mxu0 0.0
  %227 = vmatmul.mubr.f32.gmra.mrb[0].mxu0 %v67
  %v228 = vpop.f32.mrb[0].mxu0
  %v229 = vadd.f32 %v63, %v228
  %v230 = vpop.f32.mrb[0].mxu0
  %231 = vmatprep.mubr.f32.mxu0 0.0
  %232 = vmatmul.mubr.f32.gmra.mrb[0].mxu0 %v70
  %v233 = vpop.f32.mrb[0].mxu0
  %v234 = vadd.f32 %v63, %v233
  %v235 = vpop.f32.mrb[0].mxu0
  %236 = vmatprep.mubr.f32.mxu0 0.0
  %237 = vmatmul.mubr.f32.gmra.mrb[0].mxu0 %v73
  %v238 = vpop.f32.mrb[0].mxu0
  %v239 = vadd.f32 %v63, %v238
  %v240 = vpop.f32.mrb[0].mxu0
  %241 = vmatprep.mubr.f32.mxu0 0.0
  %242 = vmatmul.mubr.f32.gmra.mrb[0].mxu0 %v76
  %v243 = vpop.f32.mrb[0].mxu0
  %v244 = vadd.f32 %v63, %v243
  %v245 = vpop.f32.mrb[0].mxu0
  %246 = vmatprep.mubr.f32.mxu0 0.0
  %247 = vmatmul.mubr.f32.gmra.mrb[0].mxu0 %v79
  %v248 = vpop.f32.mrb[0].mxu0
  %v249 = vadd.f32 %v63, %v248
  %v250 = vpop.f32.mrb[0].mxu0
  %251 = vmatprep.mubr.f32.mxu0 0.0
  %252 = vmatmul.mubr.f32.gmra.mrb[0].mxu0 %v82
  %v253 = vpop.f32.mrb[0].mxu0
  %v254 = vadd.f32 %v63, %v253
  %v255 = vpop.f32.mrb[0].mxu0
  %256 = vmatprep.mubr.f32.mxu0 0.0
  %257 = vmatmul.mubr.f32.gmra.mrb[0].mxu0 %v85
  %v258 = vpop.f32.mrb[0].mxu0
  %v259 = vadd.f32 %v63, %v258
  %v260 = vpop.f32.mrb[0].mxu0
  %261 = vmatprep.mubr.f32.mxu0 0.0
  %262 = vmatmul.mubr.f32.gmra.mrb[0].mxu0 %v88
  %v263 = vpop.f32.mrb[0].mxu0
  %v264 = vadd.f32 %v63, %v263
  %v265 = vpop.f32.mrb[0].mxu0
  %266 = vmatprep.mubr.f32.mxu0 0.0
  %267 = vmatmul.mubr.f32.gmra.mrb[0].mxu0 %v91
  %v268 = vpop.f32.mrb[0].mxu0
  %v269 = vadd.f32 %v63, %v268
  %v270 = vpop.f32.mrb[0].mxu0
  %271 = vmatprep.mubr.f32.mxu0 0.0
  %272 = vmatmul.mubr.f32.gmra.mrb[0].mxu0 %v94
  %v273 = vpop.f32.mrb[0].mxu0
  %v274 = vadd.f32 %v63, %v273
  %v275 = vpop.f32.mrb[0].mxu0
  %276 = vmatprep.mubr.f32.mxu0 0.0
  %277 = vmatmul.mubr.f32.gmra.mrb[0].mxu0 %v97
  %v278 = vpop.f32.mrb[0].mxu0
  %v279 = vadd.f32 %v63, %v278
  %v280 = vpop.f32.mrb[0].mxu0
  %281 = vmatprep.mubr.f32.mxu0 0.0
  %282 = vmatmul.mubr.f32.gmra.mrb[0].mxu0 %v100
  %v283 = vpop.f32.mrb[0].mxu0
  %v284 = vadd.f32 %v63, %v283
  %v285 = vpop.f32.mrb[0].mxu0
  %286 = vmatprep.mubr.f32.mxu0 0.0
  %287 = vmatmul.mubr.f32.gmra.mrb[0].mxu0 %v103
  %v288 = vpop.f32.mrb[0].mxu0
  %v289 = vadd.f32 %v63, %v288
  %v290 = vpop.f32.mrb[0].mxu0
  %291 = vmatprep.mubr.f32.mxu0 0.0
  %292 = vmatmul.mubr.f32.gmra.mrb[0].mxu0 %v106
  %v293 = vpop.f32.mrb[0].mxu0
  %v294 = vadd.f32 %v63, %v293
  %v295 = vpop.f32.mrb[0].mxu0
  %296 = vmatprep.mubr.f32.mxu0 0.0
  %297 = vmatmul.mubr.f32.gmra.mrb[0].mxu0 %v109
  %v298 = vpop.f32.mrb[0].mxu0
  %v299 = vadd.f32 %v63, %v298
  %v300 = vpop.f32.mrb[0].mxu0
  %301 = vmatprep.mubr.f32.mxu0 0.0
  %302 = vmatmul.mubr.f32.gmra.mrb[0].mxu0 %v112
  %v303 = vpop.f32.mrb[0].mxu0
  %v304 = vadd.f32 %v63, %v303
  %v305 = vpop.f32.mrb[0].mxu0
  %306 = vmatprep.mubr.f32.mxu0 0.0
  %307 = vmatmul.mubr.f32.gmra.mrb[0].mxu0 %v115
  %v308 = vpop.f32.mrb[0].mxu0
  %v309 = vadd.f32 %v63, %v308
  %v310 = vpop.f32.mrb[0].mxu0
  %311 = vmatprep.mubr.f32.mxu0 0.0
  %312 = vmatmul.mubr.f32.gmra.mrb[0].mxu0 %v118
  %v313 = vpop.f32.mrb[0].mxu0
  %v314 = vadd.f32 %v63, %v313
  %v315 = vpop.f32.mrb[0].mxu0
  %316 = vmatprep.mubr.f32.mxu0 0.0
  %317 = vmatmul.mubr.f32.gmra.mrb[0].mxu0 %v121
  %v318 = vpop.f32.mrb[0].mxu0
  %v319 = vadd.f32 %v63, %v318
  %v320 = vpop.f32.mrb[0].mxu0
  %321 = vmatprep.mubr.f32.mxu0 0.0
  %322 = vmatmul.mubr.f32.gmra.mrb[0].mxu0 %v124
  %v323 = vpop.f32.mrb[0].mxu0
  %v324 = vadd.f32 %v63, %v323
  %v325 = vpop.f32.mrb[0].mxu0
  %326 = vmatprep.mubr.f32.mxu0 0.0
  %327 = vmatmul.mubr.f32.gmra.mrb[0].mxu0 %v127
  %v328 = vpop.f32.mrb[0].mxu0
  %v329 = vadd.f32 %v63, %v328
  %v330 = vpop.f32.mrb[0].mxu0
  %331 = vmatprep.mubr.f32.mxu0 0.0
  %332 = vmatmul.mubr.f32.gmra.mrb[0].mxu0 %v130
  %v333 = vpop.f32.mrb[0].mxu0
  %v334 = vadd.f32 %v63, %v333
  %v335 = vpop.f32.mrb[0].mxu0
  %336 = vmatprep.mubr.f32.mxu0 0.0
  %337 = vmatmul.mubr.f32.gmra.mrb[0].mxu0 %v133
  %v338 = vpop.f32.mrb[0].mxu0
  %v339 = vadd.f32 %v63, %v338
  %v340 = vpop.f32.mrb[0].mxu0
  %341 = vmatprep.mubr.f32.mxu0 0.0
  %342 = vmatmul.mubr.f32.gmra.mrb[0].mxu0 %v136
  %v343 = vpop.f32.mrb[0].mxu0
  %v344 = vadd.f32 %v63, %v343
  %v345 = vpop.f32.mrb[0].mxu0
  %346 = vmatprep.mubr.f32.mxu0 0.0
  %347 = vmatmul.mubr.f32.gmra.mrb[0].mxu0 %v139
  %v348 = vpop.f32.mrb[0].mxu0
  %v349 = vadd.f32 %v63, %v348
  %v350 = vpop.f32.mrb[0].mxu0
  %351 = vmatprep.mubr.f32.mxu0 0.0
  %352 = vmatmul.mubr.f32.gmra.mrb[0].mxu0 %v142
  %v353 = vpop.f32.mrb[0].mxu0
  %v354 = vadd.f32 %v63, %v353
  %v355 = vpop.f32.mrb[0].mxu0
  %356 = vmatprep.mubr.f32.mxu0 0.0
  %357 = vmatmul.mubr.f32.gmra.mrb[0].mxu0 %v145
  %v358 = vpop.f32.mrb[0].mxu0
  %v359 = vadd.f32 %v63, %v358
  %v360 = vpop.f32.mrb[0].mxu0
  %361 = vmatprep.mubr.f32.mxu0 0.0
  %362 = vmatmul.mubr.f32.gmra.mrb[0].mxu0 %v148
  %v363 = vpop.f32.mrb[0].mxu0
  %v364 = vadd.f32 %v63, %v363
  %v365 = vpop.f32.mrb[0].mxu0
  %366 = vmatprep.mubr.f32.mxu0 0.0
  %367 = vmatmul.mubr.f32.gmra.mrb[0].mxu0 %v151
  %v368 = vpop.f32.mrb[0].mxu0
  %v369 = vadd.f32 %v63, %v368
  %v370 = vpop.f32.mrb[0].mxu0
  %371 = vmatprep.mubr.f32.mxu0 0.0
  %372 = vmatmul.mubr.f32.gmra.mrb[0].mxu0 %v154
  %v373 = vpop.f32.mrb[0].mxu0
  %v374 = vadd.f32 %v63, %v373
  %v375 = vpop.f32.mrb[0].mxu0
  %376 = vmatprep.mubr.f32.mxu0 0.0
  %377 = vmatmul.mubr.f32.gmra.mrb[0].mxu0 %v157
  %v378 = vpop.f32.mrb[0].mxu0
  %v379 = vadd.f32 %v63, %v378
  %v380 = vpop.f32.mrb[0].mxu0
  %381 = vmatprep.mubr.f32.mxu0 0.0
  %382 = vmatmul.mubr.f32.gmra.mrb[0].mxu0 %v160
  %v383 = vpop.f32.mrb[0].mxu0
  %v384 = vadd.f32 %v63, %v383
  %v385 = vpop.f32.mrb[0].mxu0
  %386 = vdwg.mxu0
  %v387 = vtanh.pop %v229
  %v388 = vtanh.pop %v234
  %v389 = vtanh.pop %v239
  %v390 = vtanh.pop %v244
  %v391 = vtanh.pop %v249
  %v392 = vtanh.pop %v254
  %v393 = vtanh.pop %v259
  %v394 = vtanh.pop %v264
  %v395 = vtanh.pop %v269
  %v396 = vtanh.pop %v274
  %v397 = vtanh.pop %v279
  %v398 = vtanh.pop %v284
  %v399 = vtanh.pop %v289
  %v400 = vtanh.pop %v294
  %v401 = vtanh.pop %v299
  %v402 = vtanh.pop %v304
  %v403 = vtanh.pop %v309
  %v404 = vtanh.pop %v314
  %v405 = vtanh.pop %v319
  %v406 = vtanh.pop %v324
  %v407 = vtanh.pop %v329
  %v408 = vtanh.pop %v334
  %v409 = vtanh.pop %v339
  %v410 = vtanh.pop %v344
  %v411 = vtanh.pop %v349
  %v412 = vtanh.pop %v354
  %v413 = vtanh.pop %v359
  %v414 = vtanh.pop %v364
  %v415 = vtanh.pop %v369
  %v416 = vtanh.pop %v374
  %v417 = vtanh.pop %v379
  %v418 = vtanh.pop %v384
  %v419 = vxor.u32 %v229, 2147483648
  %v420 = vxor.u32 %v234, 2147483648
  %v421 = vxor.u32 %v239, 2147483648
  %v422 = vxor.u32 %v244, 2147483648
  %v423 = vxor.u32 %v249, 2147483648
  %v424 = vxor.u32 %v254, 2147483648
  %v425 = vxor.u32 %v259, 2147483648
  %v426 = vxor.u32 %v264, 2147483648
  %v427 = vxor.u32 %v269, 2147483648
  %v428 = vxor.u32 %v274, 2147483648
  %v429 = vxor.u32 %v279, 2147483648
  %v430 = vxor.u32 %v284, 2147483648
  %v431 = vxor.u32 %v289, 2147483648
  %v432 = vxor.u32 %v294, 2147483648
  %v433 = vxor.u32 %v299, 2147483648
  %v434 = vxor.u32 %v304, 2147483648
  %v435 = vxor.u32 %v309, 2147483648
  %v436 = vxor.u32 %v314, 2147483648
  %v437 = vxor.u32 %v319, 2147483648
  %v438 = vxor.u32 %v324, 2147483648
  %v439 = vxor.u32 %v329, 2147483648
  %v440 = vxor.u32 %v334, 2147483648
  %v441 = vxor.u32 %v339, 2147483648
  %v442 = vxor.u32 %v344, 2147483648
  %v443 = vxor.u32 %v349, 2147483648
  %v444 = vxor.u32 %v354, 2147483648
  %v445 = vxor.u32 %v359, 2147483648
  %v446 = vxor.u32 %v364, 2147483648
  %v447 = vxor.u32 %v369, 2147483648
  %v448 = vxor.u32 %v374, 2147483648
  %v449 = vxor.u32 %v379, 2147483648
  %v450 = vxor.u32 %v384, 2147483648
  %v451 = vmul.f32 %v419, 1.442695
  %v452 = vpow.pop %v451
  %v453 = vmul.f32 %v420, 1.442695
  %v454 = vpow.pop %v453
  %v455 = vmul.f32 %v421, 1.442695
  %v456 = vpow.pop %v455
  %v457 = vmul.f32 %v422, 1.442695
  %v458 = vpow.pop %v457
  %v459 = vmul.f32 %v423, 1.442695
  %v460 = vpow.pop %v459
  %v461 = vmul.f32 %v424, 1.442695
  %v462 = vpow.pop %v461
  %v463 = vmul.f32 %v425, 1.442695
  %v464 = vpow.pop %v463
  %v465 = vmul.f32 %v426, 1.442695
  %v466 = vpow.pop %v465
  %v467 = vmul.f32 %v427, 1.442695
  %v468 = vpow.pop %v467
  %v469 = vmul.f32 %v428, 1.442695
  %v470 = vpow.pop %v469
  %v471 = vmul.f32 %v429, 1.442695
  %v472 = vpow.pop %v471
  %v473 = vmul.f32 %v430, 1.442695
  %v474 = vpow.pop %v473
  %v475 = vmul.f32 %v431, 1.442695
  %v476 = vpow.pop %v475
  %v477 = vmul.f32 %v432, 1.442695
  %v478 = vpow.pop %v477
  %v479 = vmul.f32 %v433, 1.442695
  %v480 = vpow.pop %v479
  %v481 = vmul.f32 %v434, 1.442695
  %v482 = vpow.pop %v481
  %v483 = vmul.f32 %v435, 1.442695
  %v484 = vpow.pop %v483
  %v485 = vmul.f32 %v436, 1.442695
  %v486 = vpow.pop %v485
  %v487 = vmul.f32 %v437, 1.442695
  %v488 = vpow.pop %v487
  %v489 = vmul.f32 %v438, 1.442695
  %v490 = vpow.pop %v489
  %v491 = vmul.f32 %v439, 1.442695
  %v492 = vpow.pop %v491
  %v493 = vmul.f32 %v440, 1.442695
  %v494 = vpow.pop %v493
  %v495 = vmul.f32 %v441, 1.442695
  %v496 = vpow.pop %v495
  %v497 = vmul.f32 %v442, 1.442695
  %v498 = vpow.pop %v497
  %v499 = vmul.f32 %v443, 1.442695
  %v500 = vpow.pop %v499
  %v501 = vmul.f32 %v444, 1.442695
  %v502 = vpow.pop %v501
  %v503 = vmul.f32 %v445, 1.442695
  %v504 = vpow.pop %v503
  %v505 = vmul.f32 %v446, 1.442695
  %v506 = vpow.pop %v505
  %v507 = vmul.f32 %v447, 1.442695
  %v508 = vpow.pop %v507
  %v509 = vmul.f32 %v448, 1.442695
  %v510 = vpow.pop %v509
  %v511 = vmul.f32 %v449, 1.442695
  %v512 = vpow.pop %v511
  %v513 = vmul.f32 %v450, 1.442695
  %v514 = vpow.pop %v513
  %v515 = vadd.f32 %v452, 1.0
  %v516 = vadd.f32 %v454, 1.0
  %v517 = vadd.f32 %v456, 1.0
  %v518 = vadd.f32 %v458, 1.0
  %v519 = vadd.f32 %v460, 1.0
  %v520 = vadd.f32 %v462, 1.0
  %v521 = vadd.f32 %v464, 1.0
  %v522 = vadd.f32 %v466, 1.0
  %v523 = vadd.f32 %v468, 1.0
  %v524 = vadd.f32 %v470, 1.0
  %v525 = vadd.f32 %v472, 1.0
  %v526 = vadd.f32 %v474, 1.0
  %v527 = vadd.f32 %v476, 1.0
  %v528 = vadd.f32 %v478, 1.0
  %v529 = vadd.f32 %v480, 1.0
  %v530 = vadd.f32 %v482, 1.0
  %v531 = vadd.f32 %v484, 1.0
  %v532 = vadd.f32 %v486, 1.0
  %v533 = vadd.f32 %v488, 1.0
  %v534 = vadd.f32 %v490, 1.0
  %v535 = vadd.f32 %v492, 1.0
  %v536 = vadd.f32 %v494, 1.0
  %v537 = vadd.f32 %v496, 1.0
  %v538 = vadd.f32 %v498, 1.0
  %v539 = vadd.f32 %v500, 1.0
  %v540 = vadd.f32 %v502, 1.0
  %v541 = vadd.f32 %v504, 1.0
  %v542 = vadd.f32 %v506, 1.0
  %v543 = vadd.f32 %v508, 1.0
  %v544 = vadd.f32 %v510, 1.0
  %v545 = vadd.f32 %v512, 1.0
  %v546 = vadd.f32 %v514, 1.0
  %v547 = vrcp.pop %v515
  %v548 = vmul.f32 1.0, %v547
  %v549 = vrcp.pop %v516
  %v550 = vmul.f32 1.0, %v549
  %v551 = vrcp.pop %v517
  %v552 = vmul.f32 1.0, %v551
  %v553 = vrcp.pop %v518
  %v554 = vmul.f32 1.0, %v553
  %v555 = vrcp.pop %v519
  %v556 = vmul.f32 1.0, %v555
  %v557 = vrcp.pop %v520
  %v558 = vmul.f32 1.0, %v557
  %v559 = vrcp.pop %v521
  %v560 = vmul.f32 1.0, %v559
  %v561 = vrcp.pop %v522
  %v562 = vmul.f32 1.0, %v561
  %v563 = vrcp.pop %v523
  %v564 = vmul.f32 1.0, %v563
  %v565 = vrcp.pop %v524
  %v566 = vmul.f32 1.0, %v565
  %v567 = vrcp.pop %v525
  %v568 = vmul.f32 1.0, %v567
  %v569 = vrcp.pop %v526
  %v570 = vmul.f32 1.0, %v569
  %v571 = vrcp.pop %v527
  %v572 = vmul.f32 1.0, %v571
  %v573 = vrcp.pop %v528
  %v574 = vmul.f32 1.0, %v573
  %v575 = vrcp.pop %v529
  %v576 = vmul.f32 1.0, %v575
  %v577 = vrcp.pop %v530
  %v578 = vmul.f32 1.0, %v577
  %v579 = vrcp.pop %v531
  %v580 = vmul.f32 1.0, %v579
  %v581 = vrcp.pop %v532
  %v582 = vmul.f32 1.0, %v581
  %v583 = vrcp.pop %v533
  %v584 = vmul.f32 1.0, %v583
  %v585 = vrcp.pop %v534
  %v586 = vmul.f32 1.0, %v585
  %v587 = vrcp.pop %v535
  %v588 = vmul.f32 1.0, %v587
  %v589 = vrcp.pop %v536
  %v590 = vmul.f32 1.0, %v589
  %v591 = vrcp.pop %v537
  %v592 = vmul.f32 1.0, %v591
  %v593 = vrcp.pop %v538
  %v594 = vmul.f32 1.0, %v593
  %v595 = vrcp.pop %v539
  %v596 = vmul.f32 1.0, %v595
  %v597 = vrcp.pop %v540
  %v598 = vmul.f32 1.0, %v597
  %v599 = vrcp.pop %v541
  %v600 = vmul.f32 1.0, %v599
  %v601 = vrcp.pop %v542
  %v602 = vmul.f32 1.0, %v601
  %v603 = vrcp.pop %v543
  %v604 = vmul.f32 1.0, %v603
  %v605 = vrcp.pop %v544
  %v606 = vmul.f32 1.0, %v605
  %v607 = vrcp.pop %v545
  %v608 = vmul.f32 1.0, %v607
  %v609 = vrcp.pop %v546
  %v610 = vmul.f32 1.0, %v609
  %643 = vrot.lane.b32.xlu0 %v548, 112
  %v644 = vpop.permute.xlu0 %643
  %645 = vrot.lane.b32.xlu0 %v550, 112
  %v646 = vpop.permute.xlu0 %645
  %647 = vrot.lane.b32.xlu0 %v552, 112
  %v648 = vpop.permute.xlu0 %647
  %649 = vrot.lane.b32.xlu0 %v554, 112
  %v650 = vpop.permute.xlu0 %649
  %651 = vrot.lane.b32.xlu0 %v556, 112
  %v652 = vpop.permute.xlu0 %651
  %653 = vrot.lane.b32.xlu0 %v558, 112
  %v654 = vpop.permute.xlu0 %653
  %655 = vrot.lane.b32.xlu0 %v560, 112
  %v656 = vpop.permute.xlu0 %655
  %657 = vrot.lane.b32.xlu0 %v562, 112
  %v658 = vpop.permute.xlu0 %657
  %659 = vrot.lane.b32.xlu0 %v564, 112
  %v660 = vpop.permute.xlu0 %659
  %661 = vrot.lane.b32.xlu0 %v566, 112
  %v662 = vpop.permute.xlu0 %661
  %663 = vrot.lane.b32.xlu0 %v568, 112
  %v664 = vpop.permute.xlu0 %663
  %665 = vrot.lane.b32.xlu0 %v570, 112
  %v666 = vpop.permute.xlu0 %665
  %667 = vrot.lane.b32.xlu0 %v572, 112
  %v668 = vpop.permute.xlu0 %667
  %669 = vrot.lane.b32.xlu0 %v574, 112
  %v670 = vpop.permute.xlu0 %669
  %671 = vrot.lane.b32.xlu0 %v576, 112
  %v672 = vpop.permute.xlu0 %671
  %673 = vrot.lane.b32.xlu0 %v578, 112
  %v674 = vpop.permute.xlu0 %673
  %675 = vrot.lane.b32.xlu0 %v580, 112
  %v676 = vpop.permute.xlu0 %675
  %677 = vrot.lane.b32.xlu0 %v582, 112
  %v678 = vpop.permute.xlu0 %677
  %679 = vrot.lane.b32.xlu0 %v584, 112
  %v680 = vpop.permute.xlu0 %679
  %681 = vrot.lane.b32.xlu0 %v586, 112
  %v682 = vpop.permute.xlu0 %681
  %683 = vrot.lane.b32.xlu0 %v588, 112
  %v684 = vpop.permute.xlu0 %683
  %685 = vrot.lane.b32.xlu0 %v590, 112
  %v686 = vpop.permute.xlu0 %685
  %687 = vrot.lane.b32.xlu0 %v592, 112
  %v688 = vpop.permute.xlu0 %687
  %689 = vrot.lane.b32.xlu0 %v594, 112
  %v690 = vpop.permute.xlu0 %689
  %691 = vrot.lane.b32.xlu0 %v596, 112
  %v692 = vpop.permute.xlu0 %691
  %693 = vrot.lane.b32.xlu0 %v598, 112
  %v694 = vpop.permute.xlu0 %693
  %695 = vrot.lane.b32.xlu0 %v600, 112
  %v696 = vpop.permute.xlu0 %695
  %697 = vrot.lane.b32.xlu0 %v602, 112
  %v698 = vpop.permute.xlu0 %697
  %699 = vrot.lane.b32.xlu0 %v604, 112
  %v700 = vpop.permute.xlu0 %699
  %701 = vrot.lane.b32.xlu0 %v606, 112
  %v702 = vpop.permute.xlu0 %701
  %703 = vrot.lane.b32.xlu0 %v608, 112
  %v704 = vpop.permute.xlu0 %703
  %705 = vrot.lane.b32.xlu0 %v610, 112
  %v706 = vpop.permute.xlu0 %705
  %v739 = vmul.f32 %v387, %v644
  %v740 = vmul.f32 %v388, %v646
  %v741 = vmul.f32 %v389, %v648
  %v742 = vmul.f32 %v390, %v650
  %v743 = vmul.f32 %v391, %v652
  %v744 = vmul.f32 %v392, %v654
  %v745 = vmul.f32 %v393, %v656
  %v746 = vmul.f32 %v394, %v658
  %v747 = vmul.f32 %v395, %v660
  %v748 = vmul.f32 %v396, %v662
  %v749 = vmul.f32 %v397, %v664
  %v750 = vmul.f32 %v398, %v666
  %v751 = vmul.f32 %v399, %v668
  %v752 = vmul.f32 %v400, %v670
  %v753 = vmul.f32 %v401, %v672
  %v754 = vmul.f32 %v402, %v674
  %v755 = vmul.f32 %v403, %v676
  %v756 = vmul.f32 %v404, %v678
  %v757 = vmul.f32 %v405, %v680
  %v758 = vmul.f32 %v406, %v682
  %v759 = vmul.f32 %v407, %v684
  %v760 = vmul.f32 %v408, %v686
  %v761 = vmul.f32 %v409, %v688
  %v762 = vmul.f32 %v410, %v690
  %v763 = vmul.f32 %v411, %v692
  %v764 = vmul.f32 %v412, %v694
  %v765 = vmul.f32 %v413, %v696
  %v766 = vmul.f32 %v414, %v698
  %v767 = vmul.f32 %v415, %v700
  %v768 = vmul.f32 %v416, %v702
  %v769 = vmul.f32 %v417, %v704
  %v770 = vmul.f32 %v418, %v706
  %v771 = vld [vmem:[%s3] sm:$0xff]
  %v772 = vld [vmem:[%s3 + $0x8] sm:$0xff]
  %v773 = vld [vmem:[%s4] sm:$0x1]
  %v775 = vlaneseq
  %v776 = vshrl.u32 %v775, 7
  %v777 = vsub.s32 0, %v776
  %v778 = vrot.slane %v773, %v777
  %vm780 = vcmask 130048
  %v782 = vsel %vm780, %v739, 0
  %v785 = vsel %vm780, %v740, 0
  %v788 = vsel %vm780, %v741, 0
  %v791 = vsel %vm780, %v742, 0
  %v794 = vsel %vm780, %v743, 0
  %v797 = vsel %vm780, %v744, 0
  %v800 = vsel %vm780, %v745, 0
  %v803 = vsel %vm780, %v746, 0
  %v806 = vsel %vm780, %v747, 0
  %v809 = vsel %vm780, %v748, 0
  %v812 = vsel %vm780, %v749, 0
  %v815 = vsel %vm780, %v750, 0
  %v818 = vsel %vm780, %v751, 0
  %v821 = vsel %vm780, %v752, 0
  %v824 = vsel %vm780, %v753, 0
  %v827 = vsel %vm780, %v754, 0
  %v830 = vsel %vm780, %v755, 0
  %v833 = vsel %vm780, %v756, 0
  %v836 = vsel %vm780, %v757, 0
  %v839 = vsel %vm780, %v758, 0
  %v842 = vsel %vm780, %v759, 0
  %v845 = vsel %vm780, %v760, 0
  %v848 = vsel %vm780, %v761, 0
  %v851 = vsel %vm780, %v762, 0
  %v854 = vsel %vm780, %v763, 0
  %v857 = vsel %vm780, %v764, 0
  %v860 = vsel %vm780, %v765, 0
  %v863 = vsel %vm780, %v766, 0
  %v866 = vsel %vm780, %v767, 0
  %v869 = vsel %vm780, %v768, 0
  %v872 = vsel %vm780, %v769, 0
  %v875 = vsel %vm780, %v770, 0
  %877 = vmatprep.subr.mxu0 0.0
  %878 = vmatpush1.msra.mxu0 %v771
  %879 = vmatprep.subr.mxu0 0.0
  %880 = vmatpush1.msra.mxu0 %v772
  %881 = vmatprep.subr.mxu0 0.0
  %882 = vmatpush1.msra.mxu0 0.0
  %883 = vmatprep.subr.mxu0 0.0
  %884 = vmatpush1.msra.mxu0 0.0
  %885 = vmatprep.subr.mxu0 0.0
  %886 = vmatpush1.msra.mxu0 0.0
  %887 = vmatprep.subr.mxu0 0.0
  %888 = vmatpush1.msra.mxu0 0.0
  %889 = vmatprep.subr.mxu0 0.0
  %890 = vmatpush1.msra.mxu0 0.0
  %891 = vmatprep.subr.mxu0 0.0
  %892 = vmatpush1.msra.mxu0 0.0
  %893 = vmatprep.subr.mxu0 0.0
  %894 = vmatpush1.msra.mxu0 0.0
  %895 = vmatprep.subr.mxu0 0.0
  %896 = vmatpush1.msra.mxu0 0.0
  %897 = vmatprep.subr.mxu0 0.0
  %898 = vmatpush1.msra.mxu0 0.0
  %899 = vmatprep.subr.mxu0 0.0
  %900 = vmatpush1.msra.mxu0 0.0
  %901 = vmatprep.subr.mxu0 0.0
  %902 = vmatpush1.msra.mxu0 0.0
  %903 = vmatprep.subr.mxu0 0.0
  %904 = vmatpush1.msra.mxu0 0.0
  %905 = vmatprep.subr.mxu0 0.0
  %906 = vmatpush1.msra.mxu0 0.0
  %907 = vmatprep.subr.mxu0 0.0
  %908 = vmatpush1.msra.mxu0 0.0
  %909 = vmatprep.subr.mxu0 0.0
  %910 = vmatpush1.msra.mxu0 0.0
  %911 = vmatprep.subr.mxu0 0.0
  %912 = vmatpush1.msra.mxu0 0.0
  %913 = vmatprep.subr.mxu0 0.0
  %914 = vmatpush1.msra.mxu0 0.0
  %915 = vmatprep.subr.mxu0 0.0
  %916 = vmatpush1.msra.mxu0 0.0
  %917 = vmatprep.subr.mxu0 0.0
  %918 = vmatpush1.msra.mxu0 0.0
  %919 = vmatprep.subr.mxu0 0.0
  %920 = vmatpush1.msra.mxu0 0.0
  %921 = vmatprep.subr.mxu0 0.0
  %922 = vmatpush1.msra.mxu0 0.0
  %923 = vmatprep.subr.mxu0 0.0
  %924 = vmatpush1.msra.mxu0 0.0
  %925 = vmatprep.subr.mxu0 0.0
  %926 = vmatpush1.msra.mxu0 0.0
  %927 = vmatprep.subr.mxu0 0.0
  %928 = vmatpush1.msra.mxu0 0.0
  %929 = vmatprep.subr.mxu0 0.0
  %930 = vmatpush1.msra.mxu0 0.0
  %931 = vmatprep.subr.mxu0 0.0
  %932 = vmatpush1.msra.mxu0 0.0
  %933 = vmatprep.subr.mxu0 0.0
  %934 = vmatpush1.msra.mxu0 0.0
  %935 = vmatprep.subr.mxu0 0.0
  %936 = vmatpush1.msra.mxu0 0.0
  %937 = vmatprep.subr.mxu0 0.0
  %938 = vmatpush1.msra.mxu0 0.0
  %939 = vmatprep.subr.mxu0 0.0
  %940 = vmatpush1.msra.mxu0 0.0
  %941 = vmatprep.mubr.f32.mxu0 0.0
  %942 = vmatmul.mubr.f32.gmra.mrb[0].mxu0 %v782
  %v943 = vpop.f32.mrb[0].mxu0
  %v944 = vadd.f32 %v778, %v943
  %v945 = vpop.f32.mrb[0].mxu0
  %946 = vmatprep.mubr.f32.mxu0 0.0
  %947 = vmatmul.mubr.f32.gmra.mrb[0].mxu0 %v785
  %v948 = vpop.f32.mrb[0].mxu0
  %v949 = vadd.f32 %v778, %v948
  %v950 = vpop.f32.mrb[0].mxu0
  %951 = vmatprep.mubr.f32.mxu0 0.0
  %952 = vmatmul.mubr.f32.gmra.mrb[0].mxu0 %v788
  %v953 = vpop.f32.mrb[0].mxu0
  %v954 = vadd.f32 %v778, %v953
  %v955 = vpop.f32.mrb[0].mxu0
  %956 = vmatprep.mubr.f32.mxu0 0.0
  %957 = vmatmul.mubr.f32.gmra.mrb[0].mxu0 %v791
  %v958 = vpop.f32.mrb[0].mxu0
  %v959 = vadd.f32 %v778, %v958
  %v960 = vpop.f32.mrb[0].mxu0
  %961 = vmatprep.mubr.f32.mxu0 0.0
  %962 = vmatmul.mubr.f32.gmra.mrb[0].mxu0 %v794
  %v963 = vpop.f32.mrb[0].mxu0
  %v964 = vadd.f32 %v778, %v963
  %v965 = vpop.f32.mrb[0].mxu0
  %966 = vmatprep.mubr.f32.mxu0 0.0
  %967 = vmatmul.mubr.f32.gmra.mrb[0].mxu0 %v797
  %v968 = vpop.f32.mrb[0].mxu0
  %v969 = vadd.f32 %v778, %v968
  %v970 = vpop.f32.mrb[0].mxu0
  %971 = vmatprep.mubr.f32.mxu0 0.0
  %972 = vmatmul.mubr.f32.gmra.mrb[0].mxu0 %v800
  %v973 = vpop.f32.mrb[0].mxu0
  %v974 = vadd.f32 %v778, %v973
  %v975 = vpop.f32.mrb[0].mxu0
  %976 = vmatprep.mubr.f32.mxu0 0.0
  %977 = vmatmul.mubr.f32.gmra.mrb[0].mxu0 %v803
  %v978 = vpop.f32.mrb[0].mxu0
  %v979 = vadd.f32 %v778, %v978
  %v980 = vpop.f32.mrb[0].mxu0
  %981 = vmatprep.mubr.f32.mxu0 0.0
  %982 = vmatmul.mubr.f32.gmra.mrb[0].mxu0 %v806
  %v983 = vpop.f32.mrb[0].mxu0
  %v984 = vadd.f32 %v778, %v983
  %v985 = vpop.f32.mrb[0].mxu0
  %986 = vmatprep.mubr.f32.mxu0 0.0
  %987 = vmatmul.mubr.f32.gmra.mrb[0].mxu0 %v809
  %v988 = vpop.f32.mrb[0].mxu0
  %v989 = vadd.f32 %v778, %v988
  %v990 = vpop.f32.mrb[0].mxu0
  %991 = vmatprep.mubr.f32.mxu0 0.0
  %992 = vmatmul.mubr.f32.gmra.mrb[0].mxu0 %v812
  %v993 = vpop.f32.mrb[0].mxu0
  %v994 = vadd.f32 %v778, %v993
  %v995 = vpop.f32.mrb[0].mxu0
  %996 = vmatprep.mubr.f32.mxu0 0.0
  %997 = vmatmul.mubr.f32.gmra.mrb[0].mxu0 %v815
  %v998 = vpop.f32.mrb[0].mxu0
  %v999 = vadd.f32 %v778, %v998
  %v1000 = vpop.f32.mrb[0].mxu0
  %1001 = vmatprep.mubr.f32.mxu0 0.0
  %1002 = vmatmul.mubr.f32.gmra.mrb[0].mxu0 %v818
  %v1003 = vpop.f32.mrb[0].mxu0
  %v1004 = vadd.f32 %v778, %v1003
  %v1005 = vpop.f32.mrb[0].mxu0
  %1006 = vmatprep.mubr.f32.mxu0 0.0
  %1007 = vmatmul.mubr.f32.gmra.mrb[0].mxu0 %v821
  %v1008 = vpop.f32.mrb[0].mxu0
  %v1009 = vadd.f32 %v778, %v1008
  %v1010 = vpop.f32.mrb[0].mxu0
  %1011 = vmatprep.mubr.f32.mxu0 0.0
  %1012 = vmatmul.mubr.f32.gmra.mrb[0].mxu0 %v824
  %v1013 = vpop.f32.mrb[0].mxu0
  %v1014 = vadd.f32 %v778, %v1013
  %v1015 = vpop.f32.mrb[0].mxu0
  %1016 = vmatprep.mubr.f32.mxu0 0.0
  %1017 = vmatmul.mubr.f32.gmra.mrb[0].mxu0 %v827
  %v1018 = vpop.f32.mrb[0].mxu0
  %v1019 = vadd.f32 %v778, %v1018
  %v1020 = vpop.f32.mrb[0].mxu0
  %1021 = vmatprep.mubr.f32.mxu0 0.0
  %1022 = vmatmul.mubr.f32.gmra.mrb[0].mxu0 %v830
  %v1023 = vpop.f32.mrb[0].mxu0
  %v1024 = vadd.f32 %v778, %v1023
  %v1025 = vpop.f32.mrb[0].mxu0
  %1026 = vmatprep.mubr.f32.mxu0 0.0
  %1027 = vmatmul.mubr.f32.gmra.mrb[0].mxu0 %v833
  %v1028 = vpop.f32.mrb[0].mxu0
  %v1029 = vadd.f32 %v778, %v1028
  %v1030 = vpop.f32.mrb[0].mxu0
  %1031 = vmatprep.mubr.f32.mxu0 0.0
  %1032 = vmatmul.mubr.f32.gmra.mrb[0].mxu0 %v836
  %v1033 = vpop.f32.mrb[0].mxu0
  %v1034 = vadd.f32 %v778, %v1033
  %v1035 = vpop.f32.mrb[0].mxu0
  %1036 = vmatprep.mubr.f32.mxu0 0.0
  %1037 = vmatmul.mubr.f32.gmra.mrb[0].mxu0 %v839
  %v1038 = vpop.f32.mrb[0].mxu0
  %v1039 = vadd.f32 %v778, %v1038
  %v1040 = vpop.f32.mrb[0].mxu0
  %1041 = vmatprep.mubr.f32.mxu0 0.0
  %1042 = vmatmul.mubr.f32.gmra.mrb[0].mxu0 %v842
  %v1043 = vpop.f32.mrb[0].mxu0
  %v1044 = vadd.f32 %v778, %v1043
  %v1045 = vpop.f32.mrb[0].mxu0
  %1046 = vmatprep.mubr.f32.mxu0 0.0
  %1047 = vmatmul.mubr.f32.gmra.mrb[0].mxu0 %v845
  %v1048 = vpop.f32.mrb[0].mxu0
  %v1049 = vadd.f32 %v778, %v1048
  %v1050 = vpop.f32.mrb[0].mxu0
  %1051 = vmatprep.mubr.f32.mxu0 0.0
  %1052 = vmatmul.mubr.f32.gmra.mrb[0].mxu0 %v848
  %v1053 = vpop.f32.mrb[0].mxu0
  %v1054 = vadd.f32 %v778, %v1053
  %v1055 = vpop.f32.mrb[0].mxu0
  %1056 = vmatprep.mubr.f32.mxu0 0.0
  %1057 = vmatmul.mubr.f32.gmra.mrb[0].mxu0 %v851
  %v1058 = vpop.f32.mrb[0].mxu0
  %v1059 = vadd.f32 %v778, %v1058
  %v1060 = vpop.f32.mrb[0].mxu0
  %1061 = vmatprep.mubr.f32.mxu0 0.0
  %1062 = vmatmul.mubr.f32.gmra.mrb[0].mxu0 %v854
  %v1063 = vpop.f32.mrb[0].mxu0
  %v1064 = vadd.f32 %v778, %v1063
  %v1065 = vpop.f32.mrb[0].mxu0
  %1066 = vmatprep.mubr.f32.mxu0 0.0
  %1067 = vmatmul.mubr.f32.gmra.mrb[0].mxu0 %v857
  %v1068 = vpop.f32.mrb[0].mxu0
  %v1069 = vadd.f32 %v778, %v1068
  %v1070 = vpop.f32.mrb[0].mxu0
  %1071 = vmatprep.mubr.f32.mxu0 0.0
  %1072 = vmatmul.mubr.f32.gmra.mrb[0].mxu0 %v860
  %v1073 = vpop.f32.mrb[0].mxu0
  %v1074 = vadd.f32 %v778, %v1073
  %v1075 = vpop.f32.mrb[0].mxu0
  %1076 = vmatprep.mubr.f32.mxu0 0.0
  %1077 = vmatmul.mubr.f32.gmra.mrb[0].mxu0 %v863
  %v1078 = vpop.f32.mrb[0].mxu0
  %v1079 = vadd.f32 %v778, %v1078
  %v1080 = vpop.f32.mrb[0].mxu0
  %1081 = vmatprep.mubr.f32.mxu0 0.0
  %1082 = vmatmul.mubr.f32.gmra.mrb[0].mxu0 %v866
  %v1083 = vpop.f32.mrb[0].mxu0
  %v1084 = vadd.f32 %v778, %v1083
  %v1085 = vpop.f32.mrb[0].mxu0
  %1086 = vmatprep.mubr.f32.mxu0 0.0
  %1087 = vmatmul.mubr.f32.gmra.mrb[0].mxu0 %v869
  %v1088 = vpop.f32.mrb[0].mxu0
  %v1089 = vadd.f32 %v778, %v1088
  %v1090 = vpop.f32.mrb[0].mxu0
  %1091 = vmatprep.mubr.f32.mxu0 0.0
  %1092 = vmatmul.mubr.f32.gmra.mrb[0].mxu0 %v872
  %v1093 = vpop.f32.mrb[0].mxu0
  %v1094 = vadd.f32 %v778, %v1093
  %v1095 = vpop.f32.mrb[0].mxu0
  %1096 = vmatprep.mubr.f32.mxu0 0.0
  %1097 = vmatmul.mubr.f32.gmra.mrb[0].mxu0 %v875
  %v1098 = vpop.f32.mrb[0].mxu0
  %v1099 = vadd.f32 %v778, %v1098
  %v1100 = vpop.f32.mrb[0].mxu0
  %1101 = vdwg.mxu0
  %vm1102 = vcmask 261120
  %1103 = vst.msk [vmem:[%s5] sm:$0xff] %vm1102, %v944
  %1104 = vst.msk [vmem:[%s5 + $0x8] sm:$0xff] %vm1102, %v949
  %1105 = vst.msk [vmem:[%s5 + $0x10] sm:$0xff] %vm1102, %v954
  %1106 = vst.msk [vmem:[%s5 + $0x18] sm:$0xff] %vm1102, %v959
  %1107 = vst.msk [vmem:[%s5 + $0x20] sm:$0xff] %vm1102, %v964
  %1108 = vst.msk [vmem:[%s5 + $0x28] sm:$0xff] %vm1102, %v969
  %1109 = vst.msk [vmem:[%s5 + $0x30] sm:$0xff] %vm1102, %v974
  %1110 = vst.msk [vmem:[%s5 + $0x38] sm:$0xff] %vm1102, %v979
  %1111 = vst.msk [vmem:[%s5 + $0x40] sm:$0xff] %vm1102, %v984
  %1112 = vst.msk [vmem:[%s5 + $0x48] sm:$0xff] %vm1102, %v989
  %1113 = vst.msk [vmem:[%s5 + $0x50] sm:$0xff] %vm1102, %v994
  %1114 = vst.msk [vmem:[%s5 + $0x58] sm:$0xff] %vm1102, %v999
  %1115 = vst.msk [vmem:[%s5 + $0x60] sm:$0xff] %vm1102, %v1004
  %1116 = vst.msk [vmem:[%s5 + $0x68] sm:$0xff] %vm1102, %v1009
  %1117 = vst.msk [vmem:[%s5 + $0x70] sm:$0xff] %vm1102, %v1014
  %1118 = vst.msk [vmem:[%s5 + $0x78] sm:$0xff] %vm1102, %v1019
  %1119 = vst.msk [vmem:[%s5 + $0x80] sm:$0xff] %vm1102, %v1024
  %1120 = vst.msk [vmem:[%s5 + $0x88] sm:$0xff] %vm1102, %v1029
  %1121 = vst.msk [vmem:[%s5 + $0x90] sm:$0xff] %vm1102, %v1034
  %1122 = vst.msk [vmem:[%s5 + $0x98] sm:$0xff] %vm1102, %v1039
  %1123 = vst.msk [vmem:[%s5 + $0xa0] sm:$0xff] %vm1102, %v1044
  %1124 = vst.msk [vmem:[%s5 + $0xa8] sm:$0xff] %vm1102, %v1049
  %1125 = vst.msk [vmem:[%s5 + $0xb0] sm:$0xff] %vm1102, %v1054
  %1126 = vst.msk [vmem:[%s5 + $0xb8] sm:$0xff] %vm1102, %v1059
  %1127 = vst.msk [vmem:[%s5 + $0xc0] sm:$0xff] %vm1102, %v1064
  %1128 = vst.msk [vmem:[%s5 + $0xc8] sm:$0xff] %vm1102, %v1069
  %1129 = vst.msk [vmem:[%s5 + $0xd0] sm:$0xff] %vm1102, %v1074
  %1130 = vst.msk [vmem:[%s5 + $0xd8] sm:$0xff] %vm1102, %v1079
  %1131 = vst.msk [vmem:[%s5 + $0xe0] sm:$0xff] %vm1102, %v1084
  %1132 = vst.msk [vmem:[%s5 + $0xe8] sm:$0xff] %vm1102, %v1089
  %1133 = vst.msk [vmem:[%s5 + $0xf0] sm:$0xff] %vm1102, %v1094
  %1134 = vst.msk [vmem:[%s5 + $0xf8] sm:$0xff] %vm1102, %v1099
  // Predicated region
  $region22: #{tpu_custom_call.1} parent=0 // pred_check
    _
  $region23: #{tpu_custom_call.1} parent=0 // pred_check_branch
    %1136 = sbr.rel (0) target = $region25
  $region24: #{tpu_custom_call.1} parent=0 // pred_region
    _
  $region25: #{tpu_custom_call.1} parent=0 // pred_fallthru
    _
  // Predicated region
  $region26: #{tpu_custom_call.1} parent=0 // pred_check
    _
  $region27: #{tpu_custom_call.1} parent=0 // pred_check_branch
    %1138 = sbr.rel (0) target = $region29
  $region28: #{tpu_custom_call.1} parent=0 // pred_region
    _
  $region29: #{tpu_custom_call.1} parent=0 // pred_fallthru
    _

</llo_original>
